<compile_context>
chip_gen: v7x
topology: tpu7x:2x2x1
jax: 0.10.0
libtpu: 0.0.40
codegen_flags: <defaults>
</compile_context>

<pallas_src>
import functools

import jax
import jax.numpy as jnp
from jax.experimental import pallas as pl
from jax.experimental.pallas import tpu as pltpu

_LANE = 128
_SUBLANE = 8


def _round_up(x, m):
    return -(-x // m) * m


def _vmem_caps():
    """Returns (tile budget bytes, scoped vmem_limit_bytes), generation-aware."""
    try:
        cap = int(pltpu.get_tpu_info().vmem_capacity_bytes)
    except Exception:
        cap = 64 * 1024 * 1024  # conservative fallback: v7x per-TensorCore VMEM
    cap = max(cap, 32 * 1024 * 1024)
    limit = min(int(cap * 0.6), 100 * 1024 * 1024)  # scoped limit we request
    budget = int(limit * 0.85)                      # what the tiling may consume
    return budget, limit


def _cl_kernel_1d(o1_ref, o2_ref, label_ref, part_ref, *, margin, eps, batch, tb):
    """Tiles of shape (tb, D): batch rows on sublanes, full feature dim lane-dense."""
    i = pl.program_id(0)
    # In-kernel upcast: inputs ship over HBM in native dtype; VPU work is free filler.
    diff = o1_ref[...].astype(jnp.float32) - o2_ref[...].astype(jnp.float32) + eps   # (tb, D)
    ssq = jnp.sum(diff * diff, axis=-1, keepdims=True)                                # (tb, 1)
    d = jnp.sqrt(ssq)                                                                 # only feeds margin term
    label = label_ref[...].astype(jnp.float32)                                        # (tb, 1)
    hinge = jnp.maximum(margin - d, 0.0)
    per_row = (1.0 - label) * ssq + label * (hinge * hinge)                           # (tb, 1)
    # Mask ragged last block exactly (OOB rows read garbage, possibly NaN -> select 0).
    row = i * tb + jax.lax.broadcasted_iota(jnp.int32, (tb, 1), 0)
    per_row = jnp.where(row < batch, per_row, 0.0)
    # Lane-dense (1, 128) unmasked store of this tile's partial sum.
    part_ref[...] = jnp.full((1, _LANE), jnp.sum(per_row), dtype=jnp.float32)


def _cl_kernel_2d(o1_ref, o2_ref, label_ref, part_ref, ssq_ref, *, margin, eps,
                  batch, dim, tb, dk):
    """Feature-tiled path for very large D: tiles (tb, dk), D is an 'arbitrary' axis."""
    i = pl.program_id(0)
    k = pl.program_id(1)

    @pl.when(k == 0)
    def _():
        ssq_ref[...] = jnp.zeros_like(ssq_ref)

    diff = o1_ref[...].astype(jnp.float32) - o2_ref[...].astype(jnp.float32) + eps    # (tb, dk)
    col = k * dk + jax.lax.broadcasted_iota(jnp.int32, (tb, dk), 1)
    diff = jnp.where(col < dim, diff, 0.0)          # ragged feature block -> exact zeros
    ssq_ref[...] += jnp.sum(diff * diff, axis=-1, keepdims=True)                       # (tb, 1)

    @pl.when(k == pl.num_programs(1) - 1)
    def _():
        ssq = ssq_ref[...]
        d = jnp.sqrt(ssq)
        label = label_ref[...].astype(jnp.float32)                                     # (tb, 1)
        hinge = jnp.maximum(margin - d, 0.0)
        per_row = (1.0 - label) * ssq + label * (hinge * hinge)
        row = i * tb + jax.lax.broadcasted_iota(jnp.int32, (tb, 1), 0)
        per_row = jnp.where(row < batch, per_row, 0.0)
        part_ref[...] = jnp.full((1, _LANE), jnp.sum(per_row), dtype=jnp.float32)


def _pick_tb_1d(B, max_tb, block_b):
    if block_b is not None:
        tb = int(block_b)
    elif B <= max_tb:
        # Whole batch fits the budget: still use >= 2 tiles when the batch allows it
        # so the 'parallel' batch axis can shard across both TensorCores (v7x).
        tb = _round_up(pl.cdiv(B, 2), _SUBLANE) if B >= 2 * _SUBLANE else B
    else:
        tb = max(_SUBLANE, (max_tb // _SUBLANE) * _SUBLANE)
    tb = max(1, min(tb, B))
    if tb < B and tb % _SUBLANE != 0:
        tb = max(_SUBLANE, (tb // _SUBLANE) * _SUBLANE)
    return tb


def contrastive_loss(out1, out2, label, margin=1.0, eps=1e-6, *,
                     block_b=None, block_d=None):
    """out1, out2: (B, D) float32/bf16; label: (B,). Returns scalar float32 loss."""
    assert out1.ndim == 2 and out1.shape == out2.shape
    B, D = out1.shape
    lab = label.reshape(B, 1).astype(jnp.float32)
    itemsize = jnp.dtype(out1.dtype).itemsize
    margin = float(margin)
    eps = float(eps)

    budget, vmem_limit = _vmem_caps()

    # Steady-state VMEM bytes per batch row:
    #   2 inputs x 2 pipeline buffers x D*itemsize   (native-dtype input tiles)
    # + ~2 full-row f32 temporaries                  (in-kernel upcast / diff)
    # + label block lane-padded to 128 lanes, 2 buffers
    per_row_1d = 4 * D * itemsize + 8 * D + 2 * _LANE * 4
    max_tb = budget // per_row_1d

    use_2d = (D >= _LANE) and (block_d is not None or (max_tb < _SUBLANE and max_tb < B))

    if not use_2d:
        # --- 1-D grid over the batch; the full feature dim rides the lane axis. ---
        tb = _pick_tb_1d(B, max_tb, block_b)
        num_tiles = pl.cdiv(B, tb)
        kernel = functools.partial(_cl_kernel_1d, margin=margin, eps=eps, batch=B, tb=tb)
        partials = pl.pallas_call(
            kernel,
            out_shape=jax.ShapeDtypeStruct((num_tiles, _LANE), jnp.float32),
            grid=(num_tiles,),
            in_specs=[
                pl.BlockSpec((tb, D), lambda i: (i, 0)),
                pl.BlockSpec((tb, D), lambda i: (i, 0)),
                pl.BlockSpec((tb, 1), lambda i: (i, 0)),
            ],
            out_specs=pl.BlockSpec((1, _LANE), lambda i: (i, 0)),
            compiler_params=pltpu.CompilerParams(
                dimension_semantics=("parallel",),
                vmem_limit_bytes=vmem_limit,
            ),
        )(out1, out2, lab)
        return partials[:, 0].sum() / B

    # --- 2-D grid: batch tiles (parallel) x feature tiles (arbitrary reduction). ---
    tb = int(block_b) if block_b is not None else min(256, B)
    if tb >= B:
        tb = B
    else:
        tb = max(_SUBLANE, (tb // _SUBLANE) * _SUBLANE)
    num_b = pl.cdiv(B, tb)

    if block_d is not None:
        dk = int(block_d)
    else:
        per_col = tb * (4 * itemsize + 8)          # inputs (2x2 buffers) + f32 temps per column
        dk = (budget // per_col // _LANE) * _LANE
    dk = max(_LANE, min(dk, (D // _LANE) * _LANE))
    num_d = pl.cdiv(D, dk)

    kernel = functools.partial(_cl_kernel_2d, margin=margin, eps=eps, batch=B,
                               dim=D, tb=tb, dk=dk)
    partials = pl.pallas_call(
        kernel,
        out_shape=jax.ShapeDtypeStruct((num_b, _LANE), jnp.float32),
        grid=(num_b, num_d),
        in_specs=[
            pl.BlockSpec((tb, dk), lambda i, k: (i, k)),
            pl.BlockSpec((tb, dk), lambda i, k: (i, k)),
            pl.BlockSpec((tb, 1), lambda i, k: (i, 0)),
        ],
        out_specs=pl.BlockSpec((1, _LANE), lambda i, k: (i, 0)),
        scratch_shapes=[pltpu.VMEM((tb, 1), jnp.float32)],
        compiler_params=pltpu.CompilerParams(
            dimension_semantics=("parallel", "arbitrary"),
            vmem_limit_bytes=vmem_limit,
        ),
    )(out1, out2, lab)
    return partials[:, 0].sum() / B


def contrastive_loss_ref(out1, out2, label, margin=1.0, eps=1e-6):
    # Pure-JAX reference matching torch semantics (eps added to the difference).
    o1 = out1.astype(jnp.float32)
    o2 = out2.astype(jnp.float32)
    d = jnp.sqrt(jnp.sum(jnp.square(o1 - o2 + eps), axis=-1))
    return jnp.mean((1.0 - label) * d**2
                    + label * jnp.square(jnp.maximum(margin - d, 0.0)))


if __name__ == "__main__":
    key = jax.random.PRNGKey(0)
    ks = jax.random.split(key, 12)

    # 1) Small siamese-embedding shape (D < 128), f32: single-block path, no pad/transpose.
    B, D = 8, 32
    o1 = jax.random.normal(ks[0], (B, D), dtype=jnp.float32)
    o2 = jax.random.normal(ks[1], (B, D), dtype=jnp.float32)
    lab = jax.random.bernoulli(ks[2], 0.5, (B,)).astype(jnp.float32)
    loss = contrastive_loss(o1, o2, lab, margin=1.0)
    jax.block_until_ready(loss)
    ref = contrastive_loss_ref(o1, o2, lab, margin=1.0)
    assert jnp.allclose(loss, ref, atol=1e-5, rtol=1e-5), (loss, ref)

    # 2) bf16 inputs, D >= 128, batch split into 2 tiles with a ragged last block.
    B2, D2 = 24, 256
    o1b = jax.random.normal(ks[3], (B2, D2), dtype=jnp.bfloat16)
    o2b = jax.random.normal(ks[4], (B2, D2), dtype=jnp.bfloat16)
    lab2 = jax.random.bernoulli(ks[5], 0.5, (B2,)).astype(jnp.float32)
    loss2 = contrastive_loss(o1b, o2b, lab2, margin=1.0)
    jax.block_until_ready(loss2)
    ref2 = contrastive_loss_ref(o1b, o2b, lab2, margin=1.0)
    assert jnp.allclose(loss2, ref2, atol=1e-4, rtol=1e-4), (loss2, ref2)

    # 3) f32, forced small batch tile -> multi-tile 1-D path with ragged last block.
    B3, D3 = 77, 192
    o1c = jax.random.normal(ks[6], (B3, D3), dtype=jnp.float32)
    o2c = jax.random.normal(ks[7], (B3, D3), dtype=jnp.float32)
    lab3 = jax.random.bernoulli(ks[8], 0.5, (B3,)).astype(jnp.float32)
    loss3 = contrastive_loss(o1c, o2c, lab3, margin=1.0, block_b=32)
    jax.block_until_ready(loss3)
    ref3 = contrastive_loss_ref(o1c, o2c, lab3, margin=1.0)
    assert jnp.allclose(loss3, ref3, atol=1e-4, rtol=1e-5), (loss3, ref3)

    # 4) Feature-tiled 2-D path (ragged batch AND ragged feature blocks), forced blocks.
    B4, D4 = 13, 320
    o1d = jax.random.normal(ks[9], (B4, D4), dtype=jnp.float32)
    o2d = jax.random.normal(ks[10], (B4, D4), dtype=jnp.float32)
    lab4 = jax.random.bernoulli(ks[11], 0.5, (B4,)).astype(jnp.float32)
    loss4 = contrastive_loss(o1d, o2d, lab4, margin=1.0, block_b=8, block_d=128)
    jax.block_until_ready(loss4)
    ref4 = contrastive_loss_ref(o1d, o2d, lab4, margin=1.0)
    assert jnp.allclose(loss4, ref4, atol=1e-4, rtol=1e-5), (loss4, ref4)

    print("KERNEL_OK")
</pallas_src>

<mosaic_0001>
module attributes {stable_mosaic.version = 11 : i64} {
  func.func @_cl_kernel_1d(%arg0: i32, %arg1: memref<8x32xf32, #tpu.memory_space<vmem>>, %arg2: memref<8x32xf32, #tpu.memory_space<vmem>>, %arg3: memref<8x1xf32, #tpu.memory_space<vmem>>, %arg4: memref<1x128xf32, #tpu.memory_space<vmem>>) attributes {dimension_semantics = [#tpu.dimension_semantics<parallel>], iteration_bounds = array<i64: 1>, scalar_prefetch = 0 : i64, scratch_operands = 0 : i64, tpu.core_type = #tpu.core_type<tc>, window_params = [{transform_indices = @transform_0, window_bounds = array<i64: 8, 32>}, {transform_indices = @transform_1, window_bounds = array<i64: 8, 32>}, {transform_indices = @transform_2, window_bounds = array<i64: 8, 1>}, {transform_indices = @transform_3, window_bounds = array<i64: 1, 128>}]} {
    %c0 = arith.constant 0 : index
    %c0_0 = arith.constant 0 : index
    %0 = vector.load %arg1[%c0, %c0_0] : memref<8x32xf32, #tpu.memory_space<vmem>>, vector<8x32xf32>
    %c0_1 = arith.constant 0 : index
    %c0_2 = arith.constant 0 : index
    %1 = vector.load %arg2[%c0_1, %c0_2] : memref<8x32xf32, #tpu.memory_space<vmem>>, vector<8x32xf32>
    %2 = arith.subf %0, %1 : vector<8x32xf32>
    %cst = arith.constant 9.99999997E-7 : f32
    %3 = vector.broadcast %cst : f32 to vector<8x32xf32>
    %4 = arith.addf %2, %3 : vector<8x32xf32>
    %5 = arith.mulf %4, %4 : vector<8x32xf32>
    %cst_3 = arith.constant dense<0.000000e+00> : vector<8xf32>
    %6 = vector.multi_reduction <add>, %5, %cst_3 [1] : vector<8x32xf32> to vector<8xf32>
    %7 = vector.shape_cast %6 : vector<8xf32> to vector<8x1xf32>
    %8 = math.sqrt %7 : vector<8x1xf32>
    %c0_4 = arith.constant 0 : index
    %c0_5 = arith.constant 0 : index
    %9 = vector.load %arg3[%c0_4, %c0_5] : memref<8x1xf32, #tpu.memory_space<vmem>>, vector<8x1xf32>
    %cst_6 = arith.constant 1.000000e+00 : f32
    %10 = vector.broadcast %cst_6 : f32 to vector<8x1xf32>
    %11 = arith.subf %10, %8 : vector<8x1xf32>
    %cst_7 = arith.constant 0.000000e+00 : f32
    %12 = vector.broadcast %cst_7 : f32 to vector<8x1xf32>
    %13 = arith.maximumf %11, %12 : vector<8x1xf32>
    %cst_8 = arith.constant 1.000000e+00 : f32
    %14 = vector.broadcast %cst_8 : f32 to vector<8x1xf32>
    %15 = arith.subf %14, %9 : vector<8x1xf32>
    %16 = arith.mulf %15, %7 : vector<8x1xf32>
    %17 = arith.mulf %13, %13 : vector<8x1xf32>
    %18 = arith.mulf %9, %17 : vector<8x1xf32>
    %19 = arith.addf %16, %18 : vector<8x1xf32>
    %c8_i32 = arith.constant 8 : i32
    %20 = arith.muli %arg0, %c8_i32 : i32
    %21 = tpu.iota {dimensions = array<i32: 0>} : vector<8x1xi32>
    %22 = vector.broadcast %20 : i32 to vector<8x1xi32>
    %23 = arith.addi %22, %21 : vector<8x1xi32>
    %c8_i32_9 = arith.constant 8 : i32
    %24 = vector.broadcast %c8_i32_9 : i32 to vector<8x1xi32>
    %25 = arith.cmpi slt, %23, %24 : vector<8x1xi32>
    %cst_10 = arith.constant 0.000000e+00 : f32
    %26 = vector.broadcast %cst_10 : f32 to vector<8x1xf32>
    %27 = arith.select %25, %19, %26 : vector<8x1xi1>, vector<8x1xf32>
    %28 = vector.shape_cast %27 : vector<8x1xf32> to vector<1x8x1xf32>
    %cst_11 = arith.constant dense<0.000000e+00> : vector<1xf32>
    %29 = vector.multi_reduction <add>, %28, %cst_11 [1, 2] : vector<1x8x1xf32> to vector<1xf32>
    %30 = vector.shape_cast %29 : vector<1xf32> to vector<1x1x1xf32>
    %31 = vector.extract %30[0, 0, 0] : f32 from vector<1x1x1xf32>
    %32 = vector.broadcast %31 : f32 to vector<1x128xf32>
    %c0_12 = arith.constant 0 : index
    %c0_13 = arith.constant 0 : index
    %33 = vector.load %arg4[%c0_12, %c0_13] : memref<1x128xf32, #tpu.memory_space<vmem>>, vector<1x128xf32>
    tpu.vector_store %arg4[%c0_12, %c0_13], %32 {strides = array<i32>} : memref<1x128xf32, #tpu.memory_space<vmem>>, vector<1x128xf32>,
    return
  }
  func.func @transform_0(%arg0: i32) -> (i32, i32) {
    %c0_i32 = arith.constant 0 : i32
    %c0_i32_0 = arith.constant 0 : i32
    return %arg0, %c0_i32 : i32, i32
  }
  func.func @transform_1(%arg0: i32) -> (i32, i32) {
    %c0_i32 = arith.constant 0 : i32
    %c0_i32_0 = arith.constant 0 : i32
    return %arg0, %c0_i32 : i32, i32
  }
  func.func @transform_2(%arg0: i32) -> (i32, i32) {
    %c0_i32 = arith.constant 0 : i32
    %c0_i32_0 = arith.constant 0 : i32
    return %arg0, %c0_i32 : i32, i32
  }
  func.func @transform_3(%arg0: i32) -> (i32, i32) {
    %c0_i32 = arith.constant 0 : i32
    %c0_i32_0 = arith.constant 0 : i32
    return %arg0, %c0_i32 : i32, i32
  }
}

</mosaic_0001>

<llo_original>
// kernel: tpu_custom_call.1
$region0: #{tpu_custom_call.1}
  #allocation0 [shape = 'u32[]', space=smem, size = 0x4, offset = 0x4, fixed_abs, tag = 'smem constant byte address 0x4 - core index']
  #allocation1 [shape = 'u32[144,128]{1,0:T(1,128)}', space=vmem, size = 0x12000, scoped, tag = 'internal scratch']
  %s0 = inlined_call_operand.vmem [shape: f32[8,32], index: 0, kind: input, shape index: {}]
  %s1 = inlined_call_operand.hbm [shape: f32[8,32], index: 1, kind: input, shape index: {}]
  %s2 = inlined_call_operand.vmem [shape: f32[8,1], index: 2, kind: input, shape index: {}]
  %s3 = inlined_call_operand.hbm [shape: f32[1,128], index: 3, kind: output, shape index: {}]
  %s4 = sld [smem:[#allocation0]]
  $region26: #{tpu_custom_call.1} parent=0
    _
  %s6 = ssub.s32 1, %s4
  %s7 = scalar_select 0, %s6, %s4
  $region1: #{tpu_custom_call.1} parent=0
    #allocation2 [shape = 'u8[4096]{0}', space=vmem, size = 0x1000, scoped, tag = 'input window, operand 1, single buffered']
    #allocation3 [shape = 's32[1]{0}', space=sflag, size = 0x4, scoped, tag = 'scoped memory for tpu_custom_call.1']
    #allocation4 [shape = 's32[1]{0}', space=sflag, size = 0x4, scoped, tag = 'scoped memory for tpu_custom_call.1']
    #allocation5 [shape = 'u8[512]{0}', space=vmem, size = 0x400, scoped, tag = 'output window, operand 0, single buffered']
    %8 = vsyncpa [#allocation3], 0
    %9 = vsyncpa [#allocation4], 0
    // Predicated region
    $region2: #{tpu_custom_call.1} parent=1 // pred_check
      _
    $region3: #{tpu_custom_call.1} parent=1 // pred_check_branch
      %11 = sbr.rel (0) target = $region5
    $region4: #{tpu_custom_call.1} parent=1 // pred_region
      _
    $region5: #{tpu_custom_call.1} parent=1 // pred_fallthru
      _
    // Predicated region
    $region6: #{tpu_custom_call.1} parent=1 // pred_check
      _
    $region7: #{tpu_custom_call.1} parent=1 // pred_check_branch
      %13 = sbr.rel (0) target = $region9
    $region8: #{tpu_custom_call.1} parent=1 // pred_region
      %s15 = ssub.s32 128, 128
      %16 = vsyncadd [#allocation3], %s15
      %s18 = sshll.u32 [#allocation2], 4
      %s19 = int_to_ptr.vmem [resolvable:$true] %s18
      %21 = dma.hbm_to_vmem [thread:$0]  %s1, 128, %s19, [#allocation3]
    $region9: #{tpu_custom_call.1} parent=1 // pred_fallthru
      _
    // Predicated region
    $region10: #{tpu_custom_call.1} parent=1 // pred_check
      _
    $region11: #{tpu_custom_call.1} parent=1 // pred_check_branch
      %23 = sbr.rel (0) target = $region13
    $region12: #{tpu_custom_call.1} parent=1 // pred_region
      _
    $region13: #{tpu_custom_call.1} parent=1 // pred_fallthru
      _
    // Predicated region
    $region14: #{tpu_custom_call.1} parent=1 // pred_check
      _
    $region15: #{tpu_custom_call.1} parent=1 // pred_check_branch
      %25 = sbr.rel (0) target = $region17
    $region16: #{tpu_custom_call.1} parent=1 // pred_region
      %26 = dma.done [#allocation3], 128
    $region17: #{tpu_custom_call.1} parent=1 // pred_fallthru
      _
    %v27 = vld [vmem:[%s0] sm:$0xff]
    %v28 = vld [vmem:[#allocation2] sm:$0xff]
    %v29 = vsub.f32 %v27, %v28
    %v30 = vadd.f32 %v29, 1e-06
    %v31 = vmul.f32 %v30, %v30
    %vm32 = vcmask 261120
    %v33 = vsel %vm32, %v31, 0.0
    %34 = vadd.xlane.f32.xlu0 %v33
    %v35 = vpop.xlane.xlu0 %34
    %v36 = vrsqrt.pop %v35
    %v37 = vmul.f32 %v35, %v36
    %vm38 = vcmp.eq.f32.partialorder %v35, inf
    %v39 = vsel %vm38, %v35, %v37
    %vm40 = vcmp.eq.f32.partialorder %v35, 0.0
    %v41 = vand.u32 %v35, 2147483648
    %v42 = vsel %vm40, %v41, %v39
    %v43 = vld [vmem:[%s2] sm:$0xff]
    %v44 = vsub.f32 1.0, %v42
    %v45 = vmax.f32 %v44, 0.0
    %v46 = vsub.f32 1.0, %v43
    %v47 = vmul.f32 %v46, %v35
    %v48 = vmul.f32 %v45, %v45
    %v49 = vmul.f32 %v43, %v48
    %v50 = vadd.f32 %v47, %v49
    %s51 = smul.u32 0, 8
    %v52 = vlaneseq
    %v53 = vshrl.u32 %v52, 7
    %v54 = vstv %s51
    %v55 = vadd.s32 %v54, %v53
    %vm56 = vcmp.lt.s32.totalorder %v55, 8
    %v57 = vsel %vm56, %v50, 0.0
    %vm58 = vcmask 7168
    %v59 = vsel %vm58, %v57, 0.0
    %60 = vadd.xlane.f32.xlu0 %v59
    %v61 = vpop.xlane.xlu0 %60
    %v62 = vrot.slane %v61, 4
    %v63 = vadd.f32 %v61, %v62
    %v64 = vrot.slane %v63, 2
    %v65 = vadd.f32 %v63, %v64
    %v66 = vrot.slane %v65, 1
    %v67 = vadd.f32 %v65, %v66
    %s68 = vtos %v67
    %v69 = vstv %s68
    %70 = vst [vmem:[#allocation5] sm:$0x1] %v69
    // Predicated region
    $region18: #{tpu_custom_call.1} parent=1 // pred_check
      _
    $region19: #{tpu_custom_call.1} parent=1 // pred_check_branch
      %72 = sbr.rel (0) target = $region21
    $region20: #{tpu_custom_call.1} parent=1 // pred_region
      %s74 = ssub.s32 16, 16
      %75 = vsyncadd [#allocation4], %s74
      %s77 = sshll.u32 [#allocation5], 4
      %s78 = int_to_ptr.vmem [resolvable:$true] %s77
      %80 = dma.vmem_to_hbm [thread:$0]  %s78, 16, %s3, [#allocation4]
    $region21: #{tpu_custom_call.1} parent=1 // pred_fallthru
      _
    // Predicated region
    $region22: #{tpu_custom_call.1} parent=1 // pred_check
      _
    $region23: #{tpu_custom_call.1} parent=1 // pred_check_branch
      %82 = sbr.rel (0) target = $region25
    $region24: #{tpu_custom_call.1} parent=1 // pred_region
      %83 = dma.done [#allocation4], 16
    $region25: #{tpu_custom_call.1} parent=1 // pred_fallthru
      _
    %84 = vsyncpa [#allocation3], 1
    %85 = vsyncpa [#allocation4], 1

</llo_original>
